<compile_context>
chip_gen: v5e
topology: v5e:2x2
jax: 0.10.0
libtpu: 0.0.40
codegen_flags: <defaults>
</compile_context>

<pallas_src>
import functools
import math

import jax
import jax.numpy as jnp
from jax import lax
from jax.experimental import pallas as pl
from jax.experimental.pallas import tpu as pltpu

HIDDEN = 200          # matches the PyTorch module
HIDDEN_PAD = 256      # zero-padded hidden width used inside the kernel


def _round_up(n, m):
    return ((n + m - 1) // m) * m


def _policy_kernel(x_ref, w1_ref, b1_ref, w2_ref, b2_ref, wh_ref, bh_ref,
                   out_ref, *, action_dim):
    x = x_ref[...]

    # fc1 + leaky_relu(0.2)  (accumulate in f32; elementwise in f32)
    h1 = jnp.dot(x, w1_ref[...], preferred_element_type=jnp.float32) + b1_ref[...]
    h1 = jnp.where(h1 >= 0.0, h1, 0.2 * h1)

    # fc2 + leaky_relu(0.2)
    h2 = jnp.dot(h1.astype(w2_ref.dtype), w2_ref[...],
                 preferred_element_type=jnp.float32) + b2_ref[...]
    h2 = jnp.where(h2 >= 0.0, h2, 0.2 * h2)

    # fused heads: one matmul producing a 128-lane slab [mu_pre | sigma_pre | 0]
    y = jnp.dot(h2.astype(wh_ref.dtype), wh_ref[...],
                preferred_element_type=jnp.float32) + bh_ref[...]

    # Lane-masked select instead of slice+concat: lanes < action_dim -> tanh,
    # the rest -> numerically-stable softplus (matches F.softplus threshold=20).
    col = lax.broadcasted_iota(jnp.int32, y.shape, 1)
    mu = jnp.tanh(y)
    sp = jnp.where(y > 20.0, y, jnp.log1p(jnp.exp(jnp.minimum(y, 20.0))))
    out_ref[...] = jnp.where(col < action_dim, mu, sp)


def prepare_params(params, matmul_dtype=jnp.float32):
    """Pad hidden 200->256 (exact zero padding), fuse+pad the two heads to a
    128-lane slab, and (optionally) cast matmul operands to bf16.  Call ONCE
    and reuse the result; biases stay f32 (added after the f32 accumulation)."""
    (w1, b1, w2, b2, wmu, bmu, wsig, bsig) = params
    pad_h = HIDDEN_PAD - HIDDEN
    a2 = wmu.shape[1] + wsig.shape[1]
    head_pad = max(128, _round_up(a2, 128)) - a2

    w1p = jnp.pad(w1, ((0, 0), (0, pad_h))).astype(matmul_dtype)        # (S, 256)
    b1p = jnp.pad(b1, ((0, 0), (0, pad_h))).astype(jnp.float32)         # (1, 256)
    w2p = jnp.pad(w2, ((0, pad_h), (0, pad_h))).astype(matmul_dtype)    # (256, 256)
    b2p = jnp.pad(b2, ((0, 0), (0, pad_h))).astype(jnp.float32)         # (1, 256)
    wh = jnp.pad(jnp.concatenate([wmu, wsig], axis=1),                  # (256, >=128)
                 ((0, pad_h), (0, head_pad))).astype(matmul_dtype)
    bh = jnp.pad(jnp.concatenate([bmu, bsig], axis=1),                  # (1, >=128)
                 ((0, 0), (0, head_pad))).astype(jnp.float32)
    return (w1p, b1p, w2p, b2p, wh, bh)


def gaussian_policy_forward(x, prepared, action_dim, tb=512):
    w1, b1, w2, b2, wh, bh = prepared
    B, S = x.shape
    HP = wh.shape[1]                      # padded head width (multiple of 128)

    x_in = x.astype(w1.dtype)             # bf16 path feeds bf16 x into the MXU

    # Tile the batch: for B >= 128 always use >= 2 near-equal, 8-aligned tiles
    # (keeps both v7x TensorCores busy and minimizes padding); tiny batches use
    # one full block.
    if B < 128:
        n_tiles = 1
        tb_eff = B
    else:
        n_tiles = max(2, pl.cdiv(B, tb))
        tb_eff = _round_up(pl.cdiv(B, n_tiles), 8)
    B_pad = n_tiles * tb_eff
    if B_pad != B:
        x_in = jnp.pad(x_in, ((0, B_pad - B), (0, 0)))
    grid = (n_tiles,)

    def row_spec(cols):
        return pl.BlockSpec((tb_eff, cols), lambda i: (i, 0))

    def resident_spec(shape):
        # whole array, same block every grid step -> stays VMEM-resident
        return pl.BlockSpec(shape, lambda i: (0, 0))

    flops = 2 * B_pad * (S * HIDDEN_PAD + HIDDEN_PAD * HIDDEN_PAD + HIDDEN_PAD * HP)
    transcendentals = 3 * B_pad * HP  # tanh + exp/log1p over the whole slab
    bytes_accessed = (
        x_in.size * x_in.dtype.itemsize
        + sum(a.size * a.dtype.itemsize for a in (w1, b1, w2, b2, wh, bh))
        + B_pad * HP * 4)

    kernel = functools.partial(_policy_kernel, action_dim=action_dim)

    out = pl.pallas_call(
        kernel,
        out_shape=jax.ShapeDtypeStruct((B_pad, HP), jnp.float32),
        grid=grid,
        in_specs=[
            row_spec(S),
            resident_spec(w1.shape), resident_spec(b1.shape),
            resident_spec(w2.shape), resident_spec(b2.shape),
            resident_spec(wh.shape), resident_spec(bh.shape),
        ],
        out_specs=row_spec(HP),
        compiler_params=pltpu.CompilerParams(
            dimension_semantics=("parallel",)),
        cost_estimate=pl.CostEstimate(
            flops=flops,
            transcendentals=transcendentals,
            bytes_accessed=bytes_accessed),
    )(x_in, w1, b1, w2, b2, wh, bh)

    mu = out[:B, :action_dim]
    sigma = out[:B, action_dim:2 * action_dim]
    return mu, sigma


def init_params(key, state_dim, action_dim):
    """Mimics nn.Linear default init (uniform +/- 1/sqrt(fan_in)).
    Weights stored (in, out); biases (1, out)."""
    def linear(k, fan_in, fan_out):
        kw, kb = jax.random.split(k)
        bound = 1.0 / math.sqrt(fan_in)
        w = jax.random.uniform(kw, (fan_in, fan_out), jnp.float32, -bound, bound)
        b = jax.random.uniform(kb, (1, fan_out), jnp.float32, -bound, bound)
        return w, b

    k1, k2, k3, k4 = jax.random.split(key, 4)
    w1, b1 = linear(k1, state_dim, HIDDEN)
    w2, b2 = linear(k2, HIDDEN, HIDDEN)
    wmu, bmu = linear(k3, HIDDEN, action_dim)
    wsig, bsig = linear(k4, HIDDEN, action_dim)
    return (w1, b1, w2, b2, wmu, bmu, wsig, bsig)


def reference_forward(x, params):
    (w1, b1, w2, b2, wmu, bmu, wsig, bsig) = params
    h1 = jax.nn.leaky_relu(x @ w1 + b1, 0.2)
    h2 = jax.nn.leaky_relu(h1 @ w2 + b2, 0.2)
    mu = jnp.tanh(h2 @ wmu + bmu)
    sigma = jax.nn.softplus(h2 @ wsig + bsig)
    return mu, sigma


if __name__ == "__main__":
    state_dim, action_dim, batch = 32, 8, 8

    key = jax.random.PRNGKey(0)
    kx, kp = jax.random.split(key)
    x = jax.random.normal(kx, (batch, state_dim), jnp.float32)
    params = init_params(kp, state_dim, action_dim)

    # Hoisted: pad/fuse weights once, reuse across calls.
    prepared_f32 = prepare_params(params)
    fwd = jax.jit(gaussian_policy_forward, static_argnames=("action_dim", "tb"))

    # Small batch, single block, f32 (exact vs. reference).
    mu, sigma = fwd(x, prepared_f32, action_dim)
    jax.block_until_ready((mu, sigma))
    mu_ref, sigma_ref = reference_forward(x, params)
    assert mu.shape == (batch, action_dim) and sigma.shape == (batch, action_dim)
    assert jnp.allclose(mu, mu_ref, atol=1e-5, rtol=1e-5)
    assert jnp.allclose(sigma, sigma_ref, atol=1e-5, rtol=1e-5)

    # Larger batch: exercises the multi-tile (grid >= 2, both TCs) path.
    big_B = 600
    xb = jax.random.normal(jax.random.PRNGKey(1), (big_B, state_dim), jnp.float32)
    mu_b, sig_b = fwd(xb, prepared_f32, action_dim)
    jax.block_until_ready((mu_b, sig_b))
    mu_br, sig_br = reference_forward(xb, params)
    assert jnp.allclose(mu_b, mu_br, atol=1e-5, rtol=1e-5)
    assert jnp.allclose(sig_b, sig_br, atol=1e-5, rtol=1e-5)

    # bf16-into-MXU fast path (v6e/v7x native; f32 accumulation + f32 elementwise).
    prepared_bf16 = prepare_params(params, matmul_dtype=jnp.bfloat16)
    mu_h, sig_h = fwd(xb, prepared_bf16, action_dim)
    jax.block_until_ready((mu_h, sig_h))
    assert jnp.allclose(mu_h, mu_br, atol=5e-2, rtol=5e-2)
    assert jnp.allclose(sig_h, sig_br, atol=5e-2, rtol=5e-2)

    print("KERNEL_OK")
</pallas_src>

<mosaic_0001>
module attributes {stable_mosaic.version = 11 : i64} {
  func.func @_policy_kernel(%arg0: i32, %arg1: memref<8x32xf32, #tpu.memory_space<vmem>>, %arg2: memref<32x256xf32, #tpu.memory_space<vmem>>, %arg3: memref<1x256xf32, #tpu.memory_space<vmem>>, %arg4: memref<256x256xf32, #tpu.memory_space<vmem>>, %arg5: memref<1x256xf32, #tpu.memory_space<vmem>>, %arg6: memref<256x128xf32, #tpu.memory_space<vmem>>, %arg7: memref<1x128xf32, #tpu.memory_space<vmem>>, %arg8: memref<8x128xf32, #tpu.memory_space<vmem>>) attributes {dimension_semantics = [#tpu.dimension_semantics<parallel>], iteration_bounds = array<i64: 1>, scalar_prefetch = 0 : i64, scratch_operands = 0 : i64, tpu.core_type = #tpu.core_type<tc>, window_params = [{transform_indices = @transform_0, window_bounds = array<i64: 8, 32>}, {pipeline_mode = #tpu.pipeline_mode<synchronous>, transform_indices = @transform_1, window_bounds = array<i64: 32, 256>}, {pipeline_mode = #tpu.pipeline_mode<synchronous>, transform_indices = @transform_2, window_bounds = array<i64: 1, 256>}, {pipeline_mode = #tpu.pipeline_mode<synchronous>, transform_indices = @transform_3, window_bounds = array<i64: 256, 256>}, {pipeline_mode = #tpu.pipeline_mode<synchronous>, transform_indices = @transform_4, window_bounds = array<i64: 1, 256>}, {pipeline_mode = #tpu.pipeline_mode<synchronous>, transform_indices = @transform_5, window_bounds = array<i64: 256, 128>}, {pipeline_mode = #tpu.pipeline_mode<synchronous>, transform_indices = @transform_6, window_bounds = array<i64: 1, 128>}, {transform_indices = @transform_7, window_bounds = array<i64: 8, 128>}]} {
    %c0 = arith.constant 0 : index
    %c0_0 = arith.constant 0 : index
    %0 = vector.load %arg1[%c0, %c0_0] : memref<8x32xf32, #tpu.memory_space<vmem>>, vector<8x32xf32>
    %c0_1 = arith.constant 0 : index
    %c0_2 = arith.constant 0 : index
    %1 = vector.load %arg2[%c0_1, %c0_2] : memref<32x256xf32, #tpu.memory_space<vmem>>, vector<32x256xf32>
    %cst = arith.constant dense<0.000000e+00> : vector<8x256xf32>
    %2 = tpu.matmul %0, %1, %cst {dimension_numbers = #tpu.dot_dimension_numbers<[1], [0], [0], [1], [0, 0, 1, 1], [], []>} : vector<8x32xf32>, vector<32x256xf32>, vector<8x256xf32> -> vector<8x256xf32>
    %c0_3 = arith.constant 0 : index
    %c0_4 = arith.constant 0 : index
    %3 = vector.load %arg3[%c0_3, %c0_4] : memref<1x256xf32, #tpu.memory_space<vmem>>, vector<1x256xf32>
    %4 = vector.broadcast %3 : vector<1x256xf32> to vector<8x256xf32>
    %5 = arith.addf %2, %4 : vector<8x256xf32>
    %cst_5 = arith.constant 0.000000e+00 : f32
    %6 = vector.broadcast %cst_5 : f32 to vector<8x256xf32>
    %7 = arith.cmpf oge, %5, %6 : vector<8x256xf32>
    %cst_6 = arith.constant 2.000000e-01 : f32
    %8 = vector.broadcast %cst_6 : f32 to vector<8x256xf32>
    %9 = arith.mulf %8, %5 : vector<8x256xf32>
    %10 = arith.select %7, %5, %9 : vector<8x256xi1>, vector<8x256xf32>
    %c0_7 = arith.constant 0 : index
    %c0_8 = arith.constant 0 : index
    %11 = vector.load %arg4[%c0_7, %c0_8] : memref<256x256xf32, #tpu.memory_space<vmem>>, vector<256x256xf32>
    %cst_9 = arith.constant dense<0.000000e+00> : vector<8x256xf32>
    %12 = tpu.matmul %10, %11, %cst_9 {dimension_numbers = #tpu.dot_dimension_numbers<[1], [0], [0], [1], [0, 0, 1, 1], [], []>} : vector<8x256xf32>, vector<256x256xf32>, vector<8x256xf32> -> vector<8x256xf32>
    %c0_10 = arith.constant 0 : index
    %c0_11 = arith.constant 0 : index
    %13 = vector.load %arg5[%c0_10, %c0_11] : memref<1x256xf32, #tpu.memory_space<vmem>>, vector<1x256xf32>
    %14 = vector.broadcast %13 : vector<1x256xf32> to vector<8x256xf32>
    %15 = arith.addf %12, %14 : vector<8x256xf32>
    %cst_12 = arith.constant 0.000000e+00 : f32
    %16 = vector.broadcast %cst_12 : f32 to vector<8x256xf32>
    %17 = arith.cmpf oge, %15, %16 : vector<8x256xf32>
    %cst_13 = arith.constant 2.000000e-01 : f32
    %18 = vector.broadcast %cst_13 : f32 to vector<8x256xf32>
    %19 = arith.mulf %18, %15 : vector<8x256xf32>
    %20 = arith.select %17, %15, %19 : vector<8x256xi1>, vector<8x256xf32>
    %c0_14 = arith.constant 0 : index
    %c0_15 = arith.constant 0 : index
    %21 = vector.load %arg6[%c0_14, %c0_15] : memref<256x128xf32, #tpu.memory_space<vmem>>, vector<256x128xf32>
    %cst_16 = arith.constant dense<0.000000e+00> : vector<8x128xf32>
    %22 = tpu.matmul %20, %21, %cst_16 {dimension_numbers = #tpu.dot_dimension_numbers<[1], [0], [0], [1], [0, 0, 1, 1], [], []>} : vector<8x256xf32>, vector<256x128xf32>, vector<8x128xf32> -> vector<8x128xf32>
    %c0_17 = arith.constant 0 : index
    %c0_18 = arith.constant 0 : index
    %23 = vector.load %arg7[%c0_17, %c0_18] : memref<1x128xf32, #tpu.memory_space<vmem>>, vector<1x128xf32>
    %24 = vector.broadcast %23 : vector<1x128xf32> to vector<8x128xf32>
    %25 = arith.addf %22, %24 : vector<8x128xf32>
    %26 = tpu.iota {dimensions = array<i32: 1>} : vector<8x128xi32>
    %27 = math.tanh %25 : vector<8x128xf32>
    %cst_19 = arith.constant 2.000000e+01 : f32
    %28 = vector.broadcast %cst_19 : f32 to vector<8x128xf32>
    %29 = arith.cmpf ogt, %25, %28 : vector<8x128xf32>
    %cst_20 = arith.constant 2.000000e+01 : f32
    %30 = vector.broadcast %cst_20 : f32 to vector<8x128xf32>
    %31 = arith.minimumf %25, %30 : vector<8x128xf32>
    %32 = math.exp %31 : vector<8x128xf32>
    %33 = math.log1p %32 : vector<8x128xf32>
    %34 = arith.select %29, %25, %33 : vector<8x128xi1>, vector<8x128xf32>
    %c8_i32 = arith.constant 8 : i32
    %35 = vector.broadcast %c8_i32 : i32 to vector<8x128xi32>
    %36 = arith.cmpi slt, %26, %35 : vector<8x128xi32>
    %37 = arith.select %36, %27, %34 : vector<8x128xi1>, vector<8x128xf32>
    %c0_21 = arith.constant 0 : index
    %c0_22 = arith.constant 0 : index
    %38 = vector.load %arg8[%c0_21, %c0_22] : memref<8x128xf32, #tpu.memory_space<vmem>>, vector<8x128xf32>
    tpu.vector_store %arg8[%c0_21, %c0_22], %37 {strides = array<i32>} : memref<8x128xf32, #tpu.memory_space<vmem>>, vector<8x128xf32>,
    return
  }
  func.func @transform_0(%arg0: i32) -> (i32, i32) {
    %c0_i32 = arith.constant 0 : i32
    %c0_i32_0 = arith.constant 0 : i32
    return %arg0, %c0_i32 : i32, i32
  }
  func.func @transform_1(%arg0: i32) -> (i32, i32) {
    %c0_i32 = arith.constant 0 : i32
    %c0_i32_0 = arith.constant 0 : i32
    %c0_i32_1 = arith.constant 0 : i32
    return %c0_i32, %c0_i32_0 : i32, i32
  }
  func.func @transform_2(%arg0: i32) -> (i32, i32) {
    %c0_i32 = arith.constant 0 : i32
    %c0_i32_0 = arith.constant 0 : i32
    %c0_i32_1 = arith.constant 0 : i32
    return %c0_i32, %c0_i32_0 : i32, i32
  }
  func.func @transform_3(%arg0: i32) -> (i32, i32) {
    %c0_i32 = arith.constant 0 : i32
    %c0_i32_0 = arith.constant 0 : i32
    %c0_i32_1 = arith.constant 0 : i32
    return %c0_i32, %c0_i32_0 : i32, i32
  }
  func.func @transform_4(%arg0: i32) -> (i32, i32) {
    %c0_i32 = arith.constant 0 : i32
    %c0_i32_0 = arith.constant 0 : i32
    %c0_i32_1 = arith.constant 0 : i32
    return %c0_i32, %c0_i32_0 : i32, i32
  }
  func.func @transform_5(%arg0: i32) -> (i32, i32) {
    %c0_i32 = arith.constant 0 : i32
    %c0_i32_0 = arith.constant 0 : i32
    %c0_i32_1 = arith.constant 0 : i32
    return %c0_i32, %c0_i32_0 : i32, i32
  }
  func.func @transform_6(%arg0: i32) -> (i32, i32) {
    %c0_i32 = arith.constant 0 : i32
    %c0_i32_0 = arith.constant 0 : i32
    %c0_i32_1 = arith.constant 0 : i32
    return %c0_i32, %c0_i32_0 : i32, i32
  }
  func.func @transform_7(%arg0: i32) -> (i32, i32) {
    %c0_i32 = arith.constant 0 : i32
    %c0_i32_0 = arith.constant 0 : i32
    return %arg0, %c0_i32 : i32, i32
  }
}

</mosaic_0001>

<llo_original>
// kernel: gaussian_policy_forward.1
$region0: #{gaussian_policy_forward.1}
  #allocation0 [shape = 'u32[]', space=smem, size = 0x4, offset = 0x4, fixed_abs, tag = 'smem constant byte address 0x4 - core index']
  #allocation1 [shape = 'u32[72,128]{1,0:T(1,128)}', space=vmem, size = 0x9000, scoped, tag = 'internal scratch']
  %s0 = inlined_call_operand.hbm [shape: f32[8,32], index: 0, kind: input, shape index: {}]
  %s1 = inlined_call_operand.hbm [shape: f32[32,256], index: 1, kind: input, shape index: {}]
  %s2 = inlined_call_operand.hbm [shape: f32[1,256], index: 2, kind: input, shape index: {}]
  %s3 = inlined_call_operand.hbm [shape: f32[256,256], index: 3, kind: input, shape index: {}]
  %s4 = inlined_call_operand.vmem [shape: f32[1,256], index: 4, kind: input, shape index: {}]
  %s5 = inlined_call_operand.hbm [shape: f32[256,128], index: 5, kind: input, shape index: {}]
  %s6 = inlined_call_operand.vmem [shape: f32[1,128], index: 6, kind: input, shape index: {}]
  %s7 = inlined_call_operand.vmem [shape: f32[8,128], index: 7, kind: output, shape index: {}]
  %s8 = sld [smem:[#allocation0]]
  $region58: #{gaussian_policy_forward.1} parent=0
    _
  %s10 = ssub.s32 1, %s8
  %s11 = scalar_select 0, %s10, %s8
  $region1: #{gaussian_policy_forward.1} parent=0
    #allocation2 [shape = 'u8[4096]{0}', space=vmem, size = 0x1000, scoped, tag = 'input window, operand 0, single buffered']
    #allocation3 [shape = 's32[1]{0}', space=sflag, size = 0x4, scoped, tag = 'scoped memory for gaussian_policy_forward.1']
    #allocation4 [shape = 'u8[32768]{0}', space=vmem, size = 0x8000, scoped, tag = 'input window, operand 1, single buffered']
    #allocation5 [shape = 's32[1]{0}', space=sflag, size = 0x4, scoped, tag = 'scoped memory for gaussian_policy_forward.1']
    #allocation6 [shape = 'u8[1024]{0}', space=vmem, size = 0x400, scoped, tag = 'input window, operand 2, single buffered']
    #allocation7 [shape = 'u8[262144]{0}', space=vmem, size = 0x40000, scoped, tag = 'input window, operand 3, single buffered']
    #allocation8 [shape = 's32[1]{0}', space=sflag, size = 0x4, scoped, tag = 'scoped memory for gaussian_policy_forward.1']
    #allocation9 [shape = 'u8[131072]{0}', space=vmem, size = 0x20000, scoped, tag = 'input window, operand 5, single buffered']
    %12 = vsyncpa [#allocation3], 0
    %13 = vsyncpa [#allocation5], 0
    %14 = vsyncpa [#allocation8], 0
    // Predicated region
    $region2: #{gaussian_policy_forward.1} parent=1 // pred_check
      _
    $region3: #{gaussian_policy_forward.1} parent=1 // pred_check_branch
      %16 = sbr.rel (0) target = $region5
    $region4: #{gaussian_policy_forward.1} parent=1 // pred_region
      %18 = vsyncadd [#allocation3], 0
      %s20 = sshll.u32 %s0, 4
      %s21 = int_to_ptr.hbm [resolvable:$true] %s20
      %s22 = sshll.u32 [#allocation2], 4
      %s23 = int_to_ptr.vmem [resolvable:$true] %s22
      %25 = dma.hbm_to_vmem [thread:$0]  %s21, 128, %s23, [#allocation3]
    $region5: #{gaussian_policy_forward.1} parent=1 // pred_fallthru
      _
    // Predicated region
    $region6: #{gaussian_policy_forward.1} parent=1 // pred_check
      _
    $region7: #{gaussian_policy_forward.1} parent=1 // pred_check_branch
      %27 = sbr.rel (0) target = $region9
    $region8: #{gaussian_policy_forward.1} parent=1 // pred_region
      %29 = vsyncadd [#allocation5], 0
      %s30 = sshll.u32 %s1, 4
      %s31 = int_to_ptr.hbm [resolvable:$true] %s30
      %s32 = sshll.u32 [#allocation4], 4
      %s33 = int_to_ptr.vmem [resolvable:$true] %s32
      %38 = dma.hbm_to_vmem [thread:$0]  %s31, 1024, %s33, [#allocation5], 256, 256, 16
    $region9: #{gaussian_policy_forward.1} parent=1 // pred_fallthru
      _
    // Predicated region
    $region10: #{gaussian_policy_forward.1} parent=1 // pred_check
      _
    $region11: #{gaussian_policy_forward.1} parent=1 // pred_check_branch
      %40 = sbr.rel (0) target = $region13
    $region12: #{gaussian_policy_forward.1} parent=1 // pred_region
      %42 = vsyncadd [#allocation5], 0
      %s44 = sshll.u32 %s2, 4
      %s45 = int_to_ptr.hbm [resolvable:$true] %s44
      %s46 = sshll.u32 [#allocation6], 4
      %s47 = int_to_ptr.vmem [resolvable:$true] %s46
      %49 = dma.hbm_to_vmem [thread:$0]  %s45, 32, %s47, [#allocation5]
    $region13: #{gaussian_policy_forward.1} parent=1 // pred_fallthru
      _
    // Predicated region
    $region14: #{gaussian_policy_forward.1} parent=1 // pred_check
      _
    $region15: #{gaussian_policy_forward.1} parent=1 // pred_check_branch
      %51 = sbr.rel (0) target = $region17
    $region16: #{gaussian_policy_forward.1} parent=1 // pred_region
      %53 = vsyncadd [#allocation8], 0
      %s54 = sshll.u32 %s3, 4
      %s55 = int_to_ptr.hbm [resolvable:$true] %s54
      %s56 = sshll.u32 [#allocation7], 4
      %s57 = int_to_ptr.vmem [resolvable:$true] %s56
      %62 = dma.hbm_to_vmem [thread:$0]  %s55, 8192, %s57, [#allocation8], 256, 256, 16
    $region17: #{gaussian_policy_forward.1} parent=1 // pred_fallthru
      _
    // Predicated region
    $region18: #{gaussian_policy_forward.1} parent=1 // pred_check
      _
    $region19: #{gaussian_policy_forward.1} parent=1 // pred_check_branch
      %64 = sbr.rel (0) target = $region21
    $region20: #{gaussian_policy_forward.1} parent=1 // pred_region
      _
    $region21: #{gaussian_policy_forward.1} parent=1 // pred_fallthru
      _
    // Predicated region
    $region22: #{gaussian_policy_forward.1} parent=1 // pred_check
      _
    $region23: #{gaussian_policy_forward.1} parent=1 // pred_check_branch
      %66 = sbr.rel (0) target = $region25
    $region24: #{gaussian_policy_forward.1} parent=1 // pred_region
      %68 = vsyncadd [#allocation8], 0
      %s69 = sshll.u32 %s5, 4
      %s70 = int_to_ptr.hbm [resolvable:$true] %s69
      %s71 = sshll.u32 [#allocation9], 4
      %s72 = int_to_ptr.vmem [resolvable:$true] %s71
      %77 = dma.hbm_to_vmem [thread:$0]  %s70, 4096, %s72, [#allocation8], 128, 128, 8
    $region25: #{gaussian_policy_forward.1} parent=1 // pred_fallthru
      _
    // Predicated region
    $region26: #{gaussian_policy_forward.1} parent=1 // pred_check
      _
    $region27: #{gaussian_policy_forward.1} parent=1 // pred_check_branch
      %79 = sbr.rel (0) target = $region29
    $region28: #{gaussian_policy_forward.1} parent=1 // pred_region
      _
    $region29: #{gaussian_policy_forward.1} parent=1 // pred_fallthru
      _
    // Predicated region
    $region30: #{gaussian_policy_forward.1} parent=1 // pred_check
      _
    $region31: #{gaussian_policy_forward.1} parent=1 // pred_check_branch
      %81 = sbr.rel (0) target = $region33
    $region32: #{gaussian_policy_forward.1} parent=1 // pred_region
      %83 = dma.done [#allocation3], 128
    $region33: #{gaussian_policy_forward.1} parent=1 // pred_fallthru
      _
    // Predicated region
    $region34: #{gaussian_policy_forward.1} parent=1 // pred_check
      _
    $region35: #{gaussian_policy_forward.1} parent=1 // pred_check_branch
      %85 = sbr.rel (0) target = $region37
    $region36: #{gaussian_policy_forward.1} parent=1 // pred_region
      %87 = dma.done [#allocation5], 1024
    $region37: #{gaussian_policy_forward.1} parent=1 // pred_fallthru
      _
    // Predicated region
    $region38: #{gaussian_policy_forward.1} parent=1 // pred_check
      _
    $region39: #{gaussian_policy_forward.1} parent=1 // pred_check_branch
      %89 = sbr.rel (0) target = $region41
    $region40: #{gaussian_policy_forward.1} parent=1 // pred_region
      %91 = dma.done [#allocation5], 32
    $region41: #{gaussian_policy_forward.1} parent=1 // pred_fallthru
      _
    // Predicated region
    $region42: #{gaussian_policy_forward.1} parent=1 // pred_check
      _
    $region43: #{gaussian_policy_forward.1} parent=1 // pred_check_branch
      %93 = sbr.rel (0) target = $region45
    $region44: #{gaussian_policy_forward.1} parent=1 // pred_region
      %95 = dma.done [#allocation8], 8192
    $region45: #{gaussian_policy_forward.1} parent=1 // pred_fallthru
      _
    // Predicated region
    $region46: #{gaussian_policy_forward.1} parent=1 // pred_check
      _
    $region47: #{gaussian_policy_forward.1} parent=1 // pred_check_branch
      %97 = sbr.rel (0) target = $region49
    $region48: #{gaussian_policy_forward.1} parent=1 // pred_region
      %99 = dma.done [#allocation8], 4096
    $region49: #{gaussian_policy_forward.1} parent=1 // pred_fallthru
      _
    %v100 = vld [vmem:[#allocation2] sm:$0xff]
    %v101 = vld [vmem:[#allocation4] sm:$0xff]
    %v102 = vld [vmem:[#allocation4 + $0x8] sm:$0xff]
    %v103 = vld [vmem:[#allocation4 + $0x10] sm:$0xff]
    %v104 = vld [vmem:[#allocation4 + $0x18] sm:$0xff]
    %v105 = vld [vmem:[#allocation4 + $0x20] sm:$0xff]
    %v106 = vld [vmem:[#allocation4 + $0x28] sm:$0xff]
    %v107 = vld [vmem:[#allocation4 + $0x30] sm:$0xff]
    %v108 = vld [vmem:[#allocation4 + $0x38] sm:$0xff]
    %v109 = vld [vmem:[#allocation6] sm:$0x3]
    %v111 = vperm.slane %v109, 0
    %v112 = vperm.slane %v109, 1
    %vm115 = vcmask 261120
    %v117 = vsel %vm115, %v100, 0
    %119 = vmatpush.msra.mxu0 0.0
    %120 = vmatpush.msra.mxu0 0.0
    %121 = vmatpush.msra.mxu0 0.0
    %122 = vmatpush.msra.mxu0 0.0
    %123 = vmatpush.msra.mxu0 0.0
    %124 = vmatpush.msra.mxu0 0.0
    %125 = vmatpush.msra.mxu0 0.0
    %126 = vmatpush.msra.mxu0 0.0
    %127 = vmatpush.msra.mxu0 0.0
    %128 = vmatpush.msra.mxu0 0.0
    %129 = vmatpush.msra.mxu0 0.0
    %130 = vmatpush.msra.mxu0 0.0
    %131 = vmatpush.msra.mxu0 %v107
    %132 = vmatpush.msra.mxu0 %v105
    %133 = vmatpush.msra.mxu0 %v103
    %134 = vmatpush.msra.mxu0 %v101
    %135 = vmatmul.f32.gmra.mxu0 %v117
    %v136 = vpop.f32.mrf.mxu0
    %v137 = vadd.f32 %v111, %v136
    %138 = vdwg.mxu0
    %139 = vmatpush.msra.mxu0 0.0
    %140 = vmatpush.msra.mxu0 0.0
    %141 = vmatpush.msra.mxu0 0.0
    %142 = vmatpush.msra.mxu0 0.0
    %143 = vmatpush.msra.mxu0 0.0
    %144 = vmatpush.msra.mxu0 0.0
    %145 = vmatpush.msra.mxu0 0.0
    %146 = vmatpush.msra.mxu0 0.0
    %147 = vmatpush.msra.mxu0 0.0
    %148 = vmatpush.msra.mxu0 0.0
    %149 = vmatpush.msra.mxu0 0.0
    %150 = vmatpush.msra.mxu0 0.0
    %151 = vmatpush.msra.mxu0 %v108
    %152 = vmatpush.msra.mxu0 %v106
    %153 = vmatpush.msra.mxu0 %v104
    %154 = vmatpush.msra.mxu0 %v102
    %155 = vmatmul.f32.gmra.mxu0 %v117
    %v156 = vpop.f32.mrf.mxu0
    %v157 = vadd.f32 %v112, %v156
    %158 = vdwg.mxu0
    %vm159 = vcmp.ge.f32.partialorder %v137, 0.0
    %vm160 = vcmp.ge.f32.partialorder %v157, 0.0
    %v161 = vmul.f32 %v137, 0.2
    %v162 = vmul.f32 %v157, 0.2
    %v163 = vsel %vm159, %v137, %v161
    %v164 = vsel %vm160, %v157, %v162
    %v165 = vld [vmem:[#allocation7] sm:$0xff]
    %v166 = vld [vmem:[#allocation7 + $0x8] sm:$0xff]
    %v167 = vld [vmem:[#allocation7 + $0x10] sm:$0xff]
    %v168 = vld [vmem:[#allocation7 + $0x18] sm:$0xff]
    %v169 = vld [vmem:[#allocation7 + $0x20] sm:$0xff]
    %v170 = vld [vmem:[#allocation7 + $0x28] sm:$0xff]
    %v171 = vld [vmem:[#allocation7 + $0x30] sm:$0xff]
    %v172 = vld [vmem:[#allocation7 + $0x38] sm:$0xff]
    %v173 = vld [vmem:[#allocation7 + $0x40] sm:$0xff]
    %v174 = vld [vmem:[#allocation7 + $0x48] sm:$0xff]
    %v175 = vld [vmem:[#allocation7 + $0x50] sm:$0xff]
    %v176 = vld [vmem:[#allocation7 + $0x58] sm:$0xff]
    %v177 = vld [vmem:[#allocation7 + $0x60] sm:$0xff]
    %v178 = vld [vmem:[#allocation7 + $0x68] sm:$0xff]
    %v179 = vld [vmem:[#allocation7 + $0x70] sm:$0xff]
    %v180 = vld [vmem:[#allocation7 + $0x78] sm:$0xff]
    %v181 = vld [vmem:[#allocation7 + $0x80] sm:$0xff]
    %v182 = vld [vmem:[#allocation7 + $0x88] sm:$0xff]
    %v183 = vld [vmem:[#allocation7 + $0x90] sm:$0xff]
    %v184 = vld [vmem:[#allocation7 + $0x98] sm:$0xff]
    %v185 = vld [vmem:[#allocation7 + $0xa0] sm:$0xff]
    %v186 = vld [vmem:[#allocation7 + $0xa8] sm:$0xff]
    %v187 = vld [vmem:[#allocation7 + $0xb0] sm:$0xff]
    %v188 = vld [vmem:[#allocation7 + $0xb8] sm:$0xff]
    %v189 = vld [vmem:[#allocation7 + $0xc0] sm:$0xff]
    %v190 = vld [vmem:[#allocation7 + $0xc8] sm:$0xff]
    %v191 = vld [vmem:[#allocation7 + $0xd0] sm:$0xff]
    %v192 = vld [vmem:[#allocation7 + $0xd8] sm:$0xff]
    %v193 = vld [vmem:[#allocation7 + $0xe0] sm:$0xff]
    %v194 = vld [vmem:[#allocation7 + $0xe8] sm:$0xff]
    %v195 = vld [vmem:[#allocation7 + $0xf0] sm:$0xff]
    %v196 = vld [vmem:[#allocation7 + $0xf8] sm:$0xff]
    %v197 = vld [vmem:[#allocation7 + $0x100] sm:$0xff]
    %v198 = vld [vmem:[#allocation7 + $0x108] sm:$0xff]
    %v199 = vld [vmem:[#allocation7 + $0x110] sm:$0xff]
    %v200 = vld [vmem:[#allocation7 + $0x118] sm:$0xff]
    %v201 = vld [vmem:[#allocation7 + $0x120] sm:$0xff]
    %v202 = vld [vmem:[#allocation7 + $0x128] sm:$0xff]
    %v203 = vld [vmem:[#allocation7 + $0x130] sm:$0xff]
    %v204 = vld [vmem:[#allocation7 + $0x138] sm:$0xff]
    %v205 = vld [vmem:[#allocation7 + $0x140] sm:$0xff]
    %v206 = vld [vmem:[#allocation7 + $0x148] sm:$0xff]
    %v207 = vld [vmem:[#allocation7 + $0x150] sm:$0xff]
    %v208 = vld [vmem:[#allocation7 + $0x158] sm:$0xff]
    %v209 = vld [vmem:[#allocation7 + $0x160] sm:$0xff]
    %v210 = vld [vmem:[#allocation7 + $0x168] sm:$0xff]
    %v211 = vld [vmem:[#allocation7 + $0x170] sm:$0xff]
    %v212 = vld [vmem:[#allocation7 + $0x178] sm:$0xff]
    %v213 = vld [vmem:[#allocation7 + $0x180] sm:$0xff]
    %v214 = vld [vmem:[#allocation7 + $0x188] sm:$0xff]
    %v215 = vld [vmem:[#allocation7 + $0x190] sm:$0xff]
    %v216 = vld [vmem:[#allocation7 + $0x198] sm:$0xff]
    %v217 = vld [vmem:[#allocation7 + $0x1a0] sm:$0xff]
    %v218 = vld [vmem:[#allocation7 + $0x1a8] sm:$0xff]
    %v219 = vld [vmem:[#allocation7 + $0x1b0] sm:$0xff]
    %v220 = vld [vmem:[#allocation7 + $0x1b8] sm:$0xff]
    %v221 = vld [vmem:[#allocation7 + $0x1c0] sm:$0xff]
    %v222 = vld [vmem:[#allocation7 + $0x1c8] sm:$0xff]
    %v223 = vld [vmem:[#allocation7 + $0x1d0] sm:$0xff]
    %v224 = vld [vmem:[#allocation7 + $0x1d8] sm:$0xff]
    %v225 = vld [vmem:[#allocation7 + $0x1e0] sm:$0xff]
    %v226 = vld [vmem:[#allocation7 + $0x1e8] sm:$0xff]
    %v227 = vld [vmem:[#allocation7 + $0x1f0] sm:$0xff]
    %v228 = vld [vmem:[#allocation7 + $0x1f8] sm:$0xff]
    %v229 = vld [vmem:[%s4] sm:$0x3]
    %v231 = vperm.slane %v229, 0
    %v232 = vperm.slane %v229, 1
    %235 = vmatpush.msra.mxu0 %v195
    %236 = vmatpush.msra.mxu0 %v193
    %237 = vmatpush.msra.mxu0 %v191
    %238 = vmatpush.msra.mxu0 %v189
    %239 = vmatpush.msra.mxu0 %v187
    %240 = vmatpush.msra.mxu0 %v185
    %241 = vmatpush.msra.mxu0 %v183
    %242 = vmatpush.msra.mxu0 %v181
    %243 = vmatpush.msra.mxu0 %v179
    %244 = vmatpush.msra.mxu0 %v177
    %245 = vmatpush.msra.mxu0 %v175
    %246 = vmatpush.msra.mxu0 %v173
    %247 = vmatpush.msra.mxu0 %v171
    %248 = vmatpush.msra.mxu0 %v169
    %249 = vmatpush.msra.mxu0 %v167
    %250 = vmatpush.msra.mxu0 %v165
    %251 = vmatmul.f32.gmra.mxu0 %v163
    %v252 = vpop.f32.mrf.mxu0
    %v253 = vadd.f32 %v231, %v252
    %254 = vdwg.mxu0
    %255 = vmatpush.msra.mxu0 %v227
    %256 = vmatpush.msra.mxu0 %v225
    %257 = vmatpush.msra.mxu0 %v223
    %258 = vmatpush.msra.mxu0 %v221
    %259 = vmatpush.msra.mxu0 %v219
    %260 = vmatpush.msra.mxu0 %v217
    %261 = vmatpush.msra.mxu0 %v215
    %262 = vmatpush.msra.mxu0 %v213
    %263 = vmatpush.msra.mxu0 %v211
    %264 = vmatpush.msra.mxu0 %v209
    %265 = vmatpush.msra.mxu0 %v207
    %266 = vmatpush.msra.mxu0 %v205
    %267 = vmatpush.msra.mxu0 %v203
    %268 = vmatpush.msra.mxu0 %v201
    %269 = vmatpush.msra.mxu0 %v199
    %270 = vmatpush.msra.mxu0 %v197
    %271 = vmatmul.f32.gmra.mxu0 %v164
    %v272 = vpop.f32.mrf.mxu0
    %v273 = vadd.f32 %v253, %v272
    %274 = vdwg.mxu0
    %275 = vmatpush.msra.mxu0 %v196
    %276 = vmatpush.msra.mxu0 %v194
    %277 = vmatpush.msra.mxu0 %v192
    %278 = vmatpush.msra.mxu0 %v190
    %279 = vmatpush.msra.mxu0 %v188
    %280 = vmatpush.msra.mxu0 %v186
    %281 = vmatpush.msra.mxu0 %v184
    %282 = vmatpush.msra.mxu0 %v182
    %283 = vmatpush.msra.mxu0 %v180
    %284 = vmatpush.msra.mxu0 %v178
    %285 = vmatpush.msra.mxu0 %v176
    %286 = vmatpush.msra.mxu0 %v174
    %287 = vmatpush.msra.mxu0 %v172
    %288 = vmatpush.msra.mxu0 %v170
    %289 = vmatpush.msra.mxu0 %v168
    %290 = vmatpush.msra.mxu0 %v166
    %291 = vmatmul.f32.gmra.mxu0 %v163
    %v292 = vpop.f32.mrf.mxu0
    %v293 = vadd.f32 %v232, %v292
    %294 = vdwg.mxu0
    %295 = vmatpush.msra.mxu0 %v228
    %296 = vmatpush.msra.mxu0 %v226
    %297 = vmatpush.msra.mxu0 %v224
    %298 = vmatpush.msra.mxu0 %v222
    %299 = vmatpush.msra.mxu0 %v220
    %300 = vmatpush.msra.mxu0 %v218
    %301 = vmatpush.msra.mxu0 %v216
    %302 = vmatpush.msra.mxu0 %v214
    %303 = vmatpush.msra.mxu0 %v212
    %304 = vmatpush.msra.mxu0 %v210
    %305 = vmatpush.msra.mxu0 %v208
    %306 = vmatpush.msra.mxu0 %v206
    %307 = vmatpush.msra.mxu0 %v204
    %308 = vmatpush.msra.mxu0 %v202
    %309 = vmatpush.msra.mxu0 %v200
    %310 = vmatpush.msra.mxu0 %v198
    %311 = vmatmul.f32.gmra.mxu0 %v164
    %v312 = vpop.f32.mrf.mxu0
    %v313 = vadd.f32 %v293, %v312
    %314 = vdwg.mxu0
    %vm315 = vcmp.ge.f32.partialorder %v273, 0.0
    %vm316 = vcmp.ge.f32.partialorder %v313, 0.0
    %v317 = vmul.f32 %v273, 0.2
    %v318 = vmul.f32 %v313, 0.2
    %v319 = vsel %vm315, %v273, %v317
    %v320 = vsel %vm316, %v313, %v318
    %v321 = vld [vmem:[#allocation9] sm:$0xff]
    %v322 = vld [vmem:[#allocation9 + $0x8] sm:$0xff]
    %v323 = vld [vmem:[#allocation9 + $0x10] sm:$0xff]
    %v324 = vld [vmem:[#allocation9 + $0x18] sm:$0xff]
    %v325 = vld [vmem:[#allocation9 + $0x20] sm:$0xff]
    %v326 = vld [vmem:[#allocation9 + $0x28] sm:$0xff]
    %v327 = vld [vmem:[#allocation9 + $0x30] sm:$0xff]
    %v328 = vld [vmem:[#allocation9 + $0x38] sm:$0xff]
    %v329 = vld [vmem:[#allocation9 + $0x40] sm:$0xff]
    %v330 = vld [vmem:[#allocation9 + $0x48] sm:$0xff]
    %v331 = vld [vmem:[#allocation9 + $0x50] sm:$0xff]
    %v332 = vld [vmem:[#allocation9 + $0x58] sm:$0xff]
    %v333 = vld [vmem:[#allocation9 + $0x60] sm:$0xff]
    %v334 = vld [vmem:[#allocation9 + $0x68] sm:$0xff]
    %v335 = vld [vmem:[#allocation9 + $0x70] sm:$0xff]
    %v336 = vld [vmem:[#allocation9 + $0x78] sm:$0xff]
    %v337 = vld [vmem:[#allocation9 + $0x80] sm:$0xff]
    %v338 = vld [vmem:[#allocation9 + $0x88] sm:$0xff]
    %v339 = vld [vmem:[#allocation9 + $0x90] sm:$0xff]
    %v340 = vld [vmem:[#allocation9 + $0x98] sm:$0xff]
    %v341 = vld [vmem:[#allocation9 + $0xa0] sm:$0xff]
    %v342 = vld [vmem:[#allocation9 + $0xa8] sm:$0xff]
    %v343 = vld [vmem:[#allocation9 + $0xb0] sm:$0xff]
    %v344 = vld [vmem:[#allocation9 + $0xb8] sm:$0xff]
    %v345 = vld [vmem:[#allocation9 + $0xc0] sm:$0xff]
    %v346 = vld [vmem:[#allocation9 + $0xc8] sm:$0xff]
    %v347 = vld [vmem:[#allocation9 + $0xd0] sm:$0xff]
    %v348 = vld [vmem:[#allocation9 + $0xd8] sm:$0xff]
    %v349 = vld [vmem:[#allocation9 + $0xe0] sm:$0xff]
    %v350 = vld [vmem:[#allocation9 + $0xe8] sm:$0xff]
    %v351 = vld [vmem:[#allocation9 + $0xf0] sm:$0xff]
    %v352 = vld [vmem:[#allocation9 + $0xf8] sm:$0xff]
    %v353 = vld [vmem:[%s6] sm:$0x1]
    %v355 = vperm.slane %v353, 0
    %357 = vmatpush.msra.mxu0 %v336
    %358 = vmatpush.msra.mxu0 %v335
    %359 = vmatpush.msra.mxu0 %v334
    %360 = vmatpush.msra.mxu0 %v333
    %361 = vmatpush.msra.mxu0 %v332
    %362 = vmatpush.msra.mxu0 %v331
    %363 = vmatpush.msra.mxu0 %v330
    %364 = vmatpush.msra.mxu0 %v329
    %365 = vmatpush.msra.mxu0 %v328
    %366 = vmatpush.msra.mxu0 %v327
    %367 = vmatpush.msra.mxu0 %v326
    %368 = vmatpush.msra.mxu0 %v325
    %369 = vmatpush.msra.mxu0 %v324
    %370 = vmatpush.msra.mxu0 %v323
    %371 = vmatpush.msra.mxu0 %v322
    %372 = vmatpush.msra.mxu0 %v321
    %373 = vmatmul.f32.gmra.mxu0 %v319
    %v374 = vpop.f32.mrf.mxu0
    %v375 = vadd.f32 %v355, %v374
    %376 = vdwg.mxu0
    %377 = vmatpush.msra.mxu0 %v352
    %378 = vmatpush.msra.mxu0 %v351
    %379 = vmatpush.msra.mxu0 %v350
    %380 = vmatpush.msra.mxu0 %v349
    %381 = vmatpush.msra.mxu0 %v348
    %382 = vmatpush.msra.mxu0 %v347
    %383 = vmatpush.msra.mxu0 %v346
    %384 = vmatpush.msra.mxu0 %v345
    %385 = vmatpush.msra.mxu0 %v344
    %386 = vmatpush.msra.mxu0 %v343
    %387 = vmatpush.msra.mxu0 %v342
    %388 = vmatpush.msra.mxu0 %v341
    %389 = vmatpush.msra.mxu0 %v340
    %390 = vmatpush.msra.mxu0 %v339
    %391 = vmatpush.msra.mxu0 %v338
    %392 = vmatpush.msra.mxu0 %v337
    %393 = vmatmul.f32.gmra.mxu0 %v320
    %v394 = vpop.f32.mrf.mxu0
    %v395 = vadd.f32 %v375, %v394
    %396 = vdwg.mxu0
    %v397 = vlaneseq
    %v398 = vand.u32 %v397, 127
    %v399 = vtanh.pop %v395
    %vm400 = vcmp.gt.f32.partialorder %v395, 20.0
    %v401 = vmin.f32 %v395, 20.0
    %v402 = vmul.f32 %v401, 1.442695
    %v403 = vpow.pop %v402
    %v404 = vadd.f32 %v403, 1.0
    %v405 = vlog2.pop %v404
    %v406 = vmul.f32 %v405, 0.6931472
    %v407 = vmul.f32 -0.5, %v403
    %v408 = vadd.f32 %v407, 1.0
    %v409 = vmul.f32 %v408, %v403
    %v410 = vand.u32 2147483647, %v403
    %vm411 = vcmp.lt.f32.partialorder %v410, 0.0004427343
    %v412 = vsel %vm411, %v409, %v406
    %v413 = vsel %vm400, %v395, %v412
    %vm414 = vcmp.lt.s32.totalorder %v398, 8
    %v415 = vsel %vm414, %v399, %v413
    %416 = vst [vmem:[%s7] sm:$0xff] %v415
    // Predicated region
    $region50: #{gaussian_policy_forward.1} parent=1 // pred_check
      _
    $region51: #{gaussian_policy_forward.1} parent=1 // pred_check_branch
      %418 = sbr.rel (0) target = $region53
    $region52: #{gaussian_policy_forward.1} parent=1 // pred_region
      _
    $region53: #{gaussian_policy_forward.1} parent=1 // pred_fallthru
      _
    // Predicated region
    $region54: #{gaussian_policy_forward.1} parent=1 // pred_check
      _
    $region55: #{gaussian_policy_forward.1} parent=1 // pred_check_branch
      %420 = sbr.rel (0) target = $region57
    $region56: #{gaussian_policy_forward.1} parent=1 // pred_region
      _
    $region57: #{gaussian_policy_forward.1} parent=1 // pred_fallthru
      _
    %421 = vsyncpa [#allocation3], 1
    %422 = vsyncpa [#allocation5], 1
    %423 = vsyncpa [#allocation8], 1

</llo_original>
